<compile_context>
chip_gen: v6e
topology: v6e:2x2x1
jax: 0.10.0
libtpu: 0.0.40
codegen_flags: <defaults>
</compile_context>

<pallas_src>
import math
import functools

import jax
import jax.numpy as jnp
from jax import lax
from jax.experimental import pallas as pl
from jax.experimental.pallas import tpu as pltpu

COMPUTE_DTYPE = jnp.bfloat16   # MXU-native input dtype; accumulate in f32.
LANE = 128
SUBLANE = 8
VMEM_LIMIT_BYTES = 32 * 1024 * 1024   # scoped VMEM we request (fits v5e/v6e/v7x)
VMEM_TILE_BUDGET = 24 * 1024 * 1024   # what the vocab-tile picker aims for


def _round_up(x, m):
    return (x + m - 1) // m * m


def _pick_divisor_tile(n, quantum, max_tile):
    """Largest multiple-of-`quantum` divisor of n that is <= max_tile, else n."""
    if n <= max_tile:
        return n
    t = (max_tile // quantum) * quantum
    while t >= quantum:
        if n % t == 0:
            return t
        t -= quantum
    return n


def _pick_vocab_tile(vpad, rows, E, out_bytes,
                     budget=VMEM_TILE_BUDGET, max_tile=4096):
    """Largest multiple-of-128 divisor of vpad whose double-buffered streamed
    blocks (Wo tile + out tile) plus the resident h block fit the VMEM budget.
    This keeps tv legal on v7x (64 MiB phys) / v5e (16 MiB default scoped)
    where a blind tv=4096 with large E would not be."""
    resident = 2 * rows * E * 2                      # h block, bf16, 2x buffered
    tv = (min(vpad, max_tile) // LANE) * LANE
    while tv > LANE:
        streamed = 2 * (E * tv * 2 + rows * tv * out_bytes)
        if vpad % tv == 0 and resident + streamed <= budget:
            return tv
        tv -= LANE
    return LANE


def _pad_vocab(wo):
    """Pad the vocab (lane) dim of Wo up to a multiple of 128 (lane-dense)."""
    _, vocab = wo.shape
    vpad = _round_up(vocab, LANE)
    if vpad == vocab:
        return wo
    return jnp.pad(wo, ((0, 0), (0, vpad - vocab)))


# ---------------------------------------------------------------------------
# Kernel 1: encoder-side K/V projection. Gridded over (batch, encoder tiles),
# both axes "parallel" (pipelined DMA, megacore-splittable on v7x). Wk|Wv are
# fused into one (E, 2E) weight -> a single MXU weight push per tile.
# ---------------------------------------------------------------------------
def _kv_proj_kernel(enc_ref, wkv_ref, k_ref, v_ref, *, E):
    enc = enc_ref[0]                                              # (te, E) bf16
    kv = jnp.dot(enc, wkv_ref[...],
                 preferred_element_type=jnp.float32)              # (te, 2E) f32
    k_ref[0] = kv[:, :E].astype(k_ref.dtype)
    v_ref[0] = kv[:, E:].astype(v_ref.dtype)


def precompute_kv(encoder_output, params):
    B, e, E = encoder_output.shape
    enc = encoder_output.astype(COMPUTE_DTYPE)
    wkv = jnp.concatenate([params["wk"], params["wv"]],
                          axis=1).astype(COMPUTE_DTYPE)           # (E, 2E)
    te = _pick_divisor_tile(e, SUBLANE, 512)
    kernel = functools.partial(_kv_proj_kernel, E=E)
    k, v = pl.pallas_call(
        kernel,
        out_shape=(jax.ShapeDtypeStruct((B, e, E), COMPUTE_DTYPE),
                   jax.ShapeDtypeStruct((B, e, E), COMPUTE_DTYPE)),
        grid_spec=pltpu.PrefetchScalarGridSpec(
            num_scalar_prefetch=0,
            grid=(B, e // te),
            in_specs=[
                pl.BlockSpec((1, te, E), lambda b, i: (b, i, 0)),  # enc tile
                pl.BlockSpec((E, 2 * E), lambda b, i: (0, 0)),     # [Wk|Wv]
            ],
            out_specs=(
                pl.BlockSpec((1, te, E), lambda b, i: (b, i, 0)),
                pl.BlockSpec((1, te, E), lambda b, i: (b, i, 0)),
            ),
        ),
        compiler_params=pltpu.CompilerParams(
            dimension_semantics=("parallel", "parallel"),
            vmem_limit_bytes=VMEM_LIMIT_BYTES),
    )(enc, wkv)
    return k, v


# ---------------------------------------------------------------------------
# Kernel 2: attention. Produces h = softmax(QK^T/sqrt(E)) @ V + emb  ONCE
# (no longer repeated per vocab tile). Grid over decoder-sequence tiles.
# ---------------------------------------------------------------------------
def _attention_kernel(emb_ref, k_ref, v_ref, wq_ref, h_ref, *, scale):
    emb = emb_ref[...]                                            # (B, td, E) bf16
    B, td, E = emb.shape
    # Flatten batch -> one (B*td, E) @ (E, E) MXU pass (better row fill than a
    # per-batch loop of tiny matmuls).
    q = jnp.dot(emb.reshape(B * td, E), wq_ref[...],
                preferred_element_type=jnp.float32).reshape(B, td, E)
    # Batched contraction over E -> no materialized K^T / XLU transpose.
    s = jnp.einsum("bde,bke->bdk", q.astype(k_ref.dtype), k_ref[...],
                   preferred_element_type=jnp.float32) * scale    # (B, td, e)
    s_max = jnp.max(s, axis=-1, keepdims=True)
    p = jnp.exp(s - s_max)
    denom = jnp.sum(p, axis=-1, keepdims=True)
    attn = p / denom                       # exact divide (no approx in logits path)
    ctx = jnp.einsum("bdk,bke->bde", attn.astype(v_ref.dtype), v_ref[...],
                     preferred_element_type=jnp.float32)          # (B, td, E)
    h = ctx + emb.astype(jnp.float32)                             # residual
    h_ref[...] = h.astype(h_ref.dtype)


def _attention(emb, k, v, wq):
    B, d, E = emb.shape
    _, e, _ = k.shape
    td = _pick_divisor_tile(d, SUBLANE, 256)
    kernel = functools.partial(_attention_kernel, scale=1.0 / math.sqrt(E))
    return pl.pallas_call(
        kernel,
        out_shape=jax.ShapeDtypeStruct((B, d, E), COMPUTE_DTYPE),
        grid_spec=pltpu.PrefetchScalarGridSpec(
            num_scalar_prefetch=0,
            grid=(d // td,),
            in_specs=[
                pl.BlockSpec((B, td, E), lambda i: (0, i, 0)),    # emb tile
                pl.BlockSpec((B, e, E), lambda i: (0, 0, 0)),     # K (resident)
                pl.BlockSpec((B, e, E), lambda i: (0, 0, 0)),     # V (resident)
                pl.BlockSpec((E, E), lambda i: (0, 0)),           # Wq
            ],
            out_specs=pl.BlockSpec((B, td, E), lambda i: (0, i, 0)),
        ),
        compiler_params=pltpu.CompilerParams(
            dimension_semantics=("parallel",),
            vmem_limit_bytes=VMEM_LIMIT_BYTES),
    )(emb, k, v, wq)


# ---------------------------------------------------------------------------
# Kernel 3: vocab projection. Plain tiled matmul (B*d, E) @ (E, vpad) with a
# lane-dense, budget-aware vocab tile; both grid axes "parallel".
# ---------------------------------------------------------------------------
def _vocab_matmul_kernel(h_ref, wo_ref, out_ref):
    out_ref[...] = jnp.dot(h_ref[...], wo_ref[...],
                           preferred_element_type=jnp.float32
                           ).astype(out_ref.dtype)


def _vocab_project(h2, wo_padded, out_dtype=jnp.float32):
    rows, E = h2.shape
    vpad = wo_padded.shape[1]
    out_bytes = jnp.dtype(out_dtype).itemsize
    tm = _pick_divisor_tile(rows, SUBLANE, 512)
    tv = _pick_vocab_tile(vpad, tm, E, out_bytes)
    cost = pl.CostEstimate(
        flops=2 * rows * E * vpad,
        transcendentals=0,
        bytes_accessed=rows * E * 2 + E * vpad * 2 + rows * vpad * out_bytes)
    return pl.pallas_call(
        _vocab_matmul_kernel,
        out_shape=jax.ShapeDtypeStruct((rows, vpad), out_dtype),
        grid_spec=pltpu.PrefetchScalarGridSpec(
            num_scalar_prefetch=0,
            grid=(rows // tm, vpad // tv),
            in_specs=[
                pl.BlockSpec((tm, E), lambda i, j: (i, 0)),       # h rows
                pl.BlockSpec((E, tv), lambda i, j: (0, j)),       # Wo tile (stream)
            ],
            out_specs=pl.BlockSpec((tm, tv), lambda i, j: (i, j)),
        ),
        compiler_params=pltpu.CompilerParams(
            dimension_semantics=("parallel", "parallel"),
            vmem_limit_bytes=VMEM_LIMIT_BYTES),
        cost_estimate=cost,
    )(h2, wo_padded)


# ---------------------------------------------------------------------------
# Kernel 3b (generate hot path): fused vocab projection + argmax. Keeps the
# running max / argmax across vocab tiles in VMEM scratch and emits only
# (rows, 1) int32 tokens -> no logits HBM writeback per decode step.
# ---------------------------------------------------------------------------
def _vocab_argmax_kernel(h_ref, wo_ref, idx_ref, max_sc, *, tv, vocab_size):
    j = pl.program_id(0)

    @pl.when(j == 0)
    def _():
        max_sc[...] = jnp.full_like(max_sc, -jnp.inf)
        idx_ref[...] = jnp.zeros_like(idx_ref)

    logits = jnp.dot(h_ref[...], wo_ref[...],
                     preferred_element_type=jnp.float32)          # (rows, tv)
    col = j * tv + lax.broadcasted_iota(jnp.int32, logits.shape, 1)
    # Padded vocab columns (zero-padded Wo) must never win the argmax.
    logits = jnp.where(col < vocab_size, logits, -jnp.inf)
    tile_max = jnp.max(logits, axis=-1, keepdims=True)            # (rows, 1)
    # First-occurrence argmax within the tile, as a global column index.
    tile_arg = jnp.min(jnp.where(logits == tile_max, col, jnp.int32(2 ** 30)),
                       axis=-1, keepdims=True)
    better = tile_max > max_sc[...]                               # earlier tile wins ties
    idx_ref[...] = jnp.where(better, tile_arg, idx_ref[...])
    max_sc[...] = jnp.where(better, tile_max, max_sc[...])


def _vocab_argmax(h2, wo_padded, vocab_size):
    rows, E = h2.shape
    vpad = wo_padded.shape[1]
    tv = _pick_vocab_tile(vpad, rows, E, 0)
    kernel = functools.partial(_vocab_argmax_kernel, tv=tv, vocab_size=vocab_size)
    return pl.pallas_call(
        kernel,
        out_shape=jax.ShapeDtypeStruct((rows, 1), jnp.int32),
        grid_spec=pltpu.PrefetchScalarGridSpec(
            num_scalar_prefetch=0,
            grid=(vpad // tv,),
            in_specs=[
                pl.BlockSpec((rows, E), lambda j: (0, 0)),        # h (resident)
                pl.BlockSpec((E, tv), lambda j: (0, j)),          # Wo tile (stream)
            ],
            out_specs=pl.BlockSpec((rows, 1), lambda j: (0, 0)),  # accumulator
            scratch_shapes=[pltpu.VMEM((rows, 1), jnp.float32)],
        ),
        compiler_params=pltpu.CompilerParams(
            dimension_semantics=("arbitrary",),                   # running argmax
            vmem_limit_bytes=VMEM_LIMIT_BYTES),
    )(h2, wo_padded)


# ---------------------------------------------------------------------------
# Forward / generate wrappers.
# ---------------------------------------------------------------------------
def decoder_forward(encoder_output, decoder_input, params):
    """Single forward step. Returns logits of shape (B, d, vocab)."""
    B, d = decoder_input.shape
    vocab_size, _ = params["emb_table"].shape
    E = params["wq"].shape[0]
    k, v = precompute_kv(encoder_output, params)
    # TODO(synk): move the embedding gather into the attention kernel via
    # scalar-prefetch of token ids + pl.Element row indexing on emb_table to
    # avoid the (B, d, E) HBM intermediate (matters once B*d*E is tens of MB).
    emb = jnp.take(params["emb_table"], decoder_input,
                   axis=0).astype(COMPUTE_DTYPE)
    wq = params["wq"].astype(COMPUTE_DTYPE)
    wo_padded = _pad_vocab(params["wo"].astype(COMPUTE_DTYPE))
    h = _attention(emb, k, v, wq)                                 # (B, d, E) bf16
    logits = _vocab_project(h.reshape(B * d, E), wo_padded)       # (B*d, vpad) f32
    return logits.reshape(B, d, -1)[..., :vocab_size]


def decoder_generate(encoder_output, decoder_input, params,
                     max_target_length=3):
    """Mirrors the base-class `generate` (autoregressive argmax decoding)."""
    B, d0 = decoder_input.shape
    vocab_size, _ = params["emb_table"].shape
    E = params["wq"].shape[0]
    L = d0 + max_target_length - 1

    # K/V hoisted out of the decode loop (independent of decoder tokens).
    k, v = precompute_kv(encoder_output, params)
    wq = params["wq"].astype(COMPUTE_DTYPE)
    wo_padded = _pad_vocab(params["wo"].astype(COMPUTE_DTYPE))
    emb_table = params["emb_table"]

    # Fixed-size token buffer -> static shapes, no retrace/recompile per step.
    tokens = jnp.zeros((B, L), decoder_input.dtype)
    tokens = lax.dynamic_update_slice(tokens, decoder_input, (0, 0))

    # Cross-attention only -> positions are independent, so each decode step
    # needs only the newest token. The fused argmax kernel emits just (B, 1)
    # int32 tokens (no per-step logits writeback; softmax dropped since argmax
    # is invariant under it). The final full forward reproduces the base-class
    # return value exactly.
    last_tok = decoder_input[:, -1:]
    for t in range(max_target_length - 1):
        emb_last = jnp.take(emb_table, last_tok, axis=0).astype(COMPUTE_DTYPE)
        h_last = _attention(emb_last, k, v, wq)                   # (B, 1, E)
        nxt = _vocab_argmax(h_last.reshape(B, E), wo_padded, vocab_size)  # (B, 1)
        tokens = lax.dynamic_update_slice(
            tokens, nxt.astype(tokens.dtype), (0, d0 + t))
        last_tok = nxt.astype(last_tok.dtype)

    emb = jnp.take(emb_table, tokens, axis=0).astype(COMPUTE_DTYPE)
    h = _attention(emb, k, v, wq)
    logits = _vocab_project(h.reshape(B * L, E), wo_padded)
    return logits.reshape(B, L, -1)[..., :vocab_size]


# ---------------------------------------------------------------------------
# Pure-JAX reference (mirrors the in-kernel bf16 casts / f32 accumulation).
# ---------------------------------------------------------------------------
def _reference_forward(encoder_output, decoder_input, params):
    E = encoder_output.shape[-1]
    dt = COMPUTE_DTYPE
    emb = jnp.take(params["emb_table"], decoder_input, axis=0).astype(dt)
    enc = encoder_output.astype(dt)
    wq = params["wq"].astype(dt)
    wk = params["wk"].astype(dt)
    wv = params["wv"].astype(dt)
    wo = params["wo"].astype(dt)
    k = jnp.einsum("bed,df->bef", enc, wk,
                   preferred_element_type=jnp.float32).astype(dt)
    v = jnp.einsum("bed,df->bef", enc, wv,
                   preferred_element_type=jnp.float32).astype(dt)
    q = jnp.einsum("bde,ef->bdf", emb, wq,
                   preferred_element_type=jnp.float32).astype(dt)
    s = jnp.einsum("bde,bke->bdk", q, k,
                   preferred_element_type=jnp.float32) / math.sqrt(E)
    attn = jax.nn.softmax(s, axis=-1)
    ctx = jnp.einsum("bdk,bke->bde", attn.astype(dt), v,
                     preferred_element_type=jnp.float32)
    h = ctx + emb.astype(jnp.float32)
    return jnp.einsum("bde,ev->bdv", h.astype(dt), wo,
                      preferred_element_type=jnp.float32)


def make_params(key, vocab_size, embed_size):
    k0, k1, k2, k3, k4 = jax.random.split(key, 5)
    scale = 1.0 / math.sqrt(embed_size)
    return {
        "emb_table": jax.random.normal(k0, (vocab_size, embed_size), jnp.float32),
        "wq": jax.random.normal(k1, (embed_size, embed_size), jnp.float32) * scale,
        "wk": jax.random.normal(k2, (embed_size, embed_size), jnp.float32) * scale,
        "wv": jax.random.normal(k3, (embed_size, embed_size), jnp.float32) * scale,
        "wo": jax.random.normal(k4, (embed_size, vocab_size), jnp.float32) * scale,
    }


if __name__ == "__main__":
    B, E_SEQ, D_SEQ, EMB, VOCAB = 2, 8, 4, 32, 64

    key = jax.random.PRNGKey(0)
    k_params, k_enc, k_dec = jax.random.split(key, 3)

    params = make_params(k_params, VOCAB, EMB)
    encoder_output = jax.random.normal(k_enc, (B, E_SEQ, EMB), jnp.float32)
    decoder_input = jax.random.randint(k_dec, (B, D_SEQ), 0, VOCAB, jnp.int32)

    # Single forward step through the Pallas kernels.
    logits = decoder_forward(encoder_output, decoder_input, params)
    logits = jax.block_until_ready(logits)
    assert logits.shape == (B, D_SEQ, VOCAB), logits.shape

    # Correctness vs. pure-JAX reference (bf16 matmul inputs, f32 accumulate).
    ref = _reference_forward(encoder_output, decoder_input, params)
    max_err = float(jnp.max(jnp.abs(logits - ref)))
    assert jnp.allclose(logits, ref, atol=1e-1, rtol=5e-2), max_err

    # Fused-argmax kernel parity against argmax over the Pallas logits.
    k_c, v_c = precompute_kv(encoder_output, params)
    wq_c = params["wq"].astype(COMPUTE_DTYPE)
    wo_p = _pad_vocab(params["wo"].astype(COMPUTE_DTYPE))
    emb_c = jnp.take(params["emb_table"], decoder_input,
                     axis=0).astype(COMPUTE_DTYPE)
    h2 = _attention(emb_c, k_c, v_c, wq_c).reshape(B * D_SEQ, EMB)
    idx_fused = _vocab_argmax(h2, wo_p, VOCAB)[:, 0]
    idx_ref = jnp.argmax(_vocab_project(h2, wo_p)[:, :VOCAB], axis=-1)
    assert jnp.array_equal(idx_fused, idx_ref.astype(idx_fused.dtype))

    # Autoregressive generate (START tokens of shape (B, 1)), base-class loop.
    start_tokens = jnp.zeros((B, 1), jnp.int32)
    max_target_length = 3
    gen_out = decoder_generate(encoder_output, start_tokens, params,
                               max_target_length=max_target_length)
    gen_out = jax.block_until_ready(gen_out)
    assert gen_out.shape == (B, 1 + max_target_length - 1, VOCAB), gen_out.shape

    print("KERNEL_OK")
</pallas_src>

<mosaic_0001>
module attributes {stable_mosaic.version = 11 : i64} {
  func.func @_kv_proj_kernel(%arg0: i32, %arg1: i32, %arg2: memref<1x8x32xbf16, #tpu.memory_space<vmem>>, %arg3: memref<32x64xbf16, #tpu.memory_space<vmem>>, %arg4: memref<1x8x32xbf16, #tpu.memory_space<vmem>>, %arg5: memref<1x8x32xbf16, #tpu.memory_space<vmem>>) attributes {dimension_semantics = [#tpu.dimension_semantics<parallel>, #tpu.dimension_semantics<parallel>], iteration_bounds = array<i64: 2, 1>, scalar_prefetch = 0 : i64, scratch_operands = 0 : i64, tpu.core_type = #tpu.core_type<tc>, window_params = [{transform_indices = @transform_0, window_bounds = array<i64: 1, 8, 32>}, {pipeline_mode = #tpu.pipeline_mode<synchronous>, transform_indices = @transform_1, window_bounds = array<i64: 32, 64>}, {transform_indices = @transform_2, window_bounds = array<i64: 1, 8, 32>}, {transform_indices = @transform_3, window_bounds = array<i64: 1, 8, 32>}]} {
    %c0 = arith.constant 0 : index
    %c0_0 = arith.constant 0 : index
    %c0_1 = arith.constant 0 : index
    %0 = vector.load %arg2[%c0, %c0_0, %c0_1] : memref<1x8x32xbf16, #tpu.memory_space<vmem>>, vector<1x8x32xbf16>
    %1 = vector.shape_cast %0 : vector<1x8x32xbf16> to vector<8x32xbf16>
    %c0_2 = arith.constant 0 : index
    %c0_3 = arith.constant 0 : index
    %2 = vector.load %arg3[%c0_2, %c0_3] : memref<32x64xbf16, #tpu.memory_space<vmem>>, vector<32x64xbf16>
    %cst = arith.constant dense<0.000000e+00> : vector<8x64xf32>
    %3 = tpu.matmul %1, %2, %cst {dimension_numbers = #tpu.dot_dimension_numbers<[1], [0], [0], [1], [0, 0, 1, 1], [], []>} : vector<8x32xbf16>, vector<32x64xbf16>, vector<8x64xf32> -> vector<8x64xf32>
    %4 = vector.extract_strided_slice %3 {offsets = [0, 0], sizes = [8, 32], strides = [1, 1]} : vector<8x64xf32> to vector<8x32xf32>
    %5 = arith.truncf %4 : vector<8x32xf32> to vector<8x32xbf16>
    %c0_4 = arith.constant 0 : index
    %c0_5 = arith.constant 0 : index
    %c0_6 = arith.constant 0 : index
    %6 = vector.load %arg4[%c0_4, %c0_5, %c0_6] : memref<1x8x32xbf16, #tpu.memory_space<vmem>>, vector<1x8x32xbf16>
    %7 = vector.shape_cast %6 : vector<1x8x32xbf16> to vector<8x32xbf16>
    %8 = vector.shape_cast %5 : vector<8x32xbf16> to vector<1x8x32xbf16>
    tpu.vector_store %arg4[%c0_4, %c0_5, %c0_6], %8 {strides = array<i32>} : memref<1x8x32xbf16, #tpu.memory_space<vmem>>, vector<1x8x32xbf16>,
    %9 = vector.extract_strided_slice %3 {offsets = [0, 32], sizes = [8, 32], strides = [1, 1]} : vector<8x64xf32> to vector<8x32xf32>
    %10 = arith.truncf %9 : vector<8x32xf32> to vector<8x32xbf16>
    %c0_7 = arith.constant 0 : index
    %c0_8 = arith.constant 0 : index
    %c0_9 = arith.constant 0 : index
    %11 = vector.load %arg5[%c0_7, %c0_8, %c0_9] : memref<1x8x32xbf16, #tpu.memory_space<vmem>>, vector<1x8x32xbf16>
    %12 = vector.shape_cast %11 : vector<1x8x32xbf16> to vector<8x32xbf16>
    %13 = vector.shape_cast %10 : vector<8x32xbf16> to vector<1x8x32xbf16>
    tpu.vector_store %arg5[%c0_7, %c0_8, %c0_9], %13 {strides = array<i32>} : memref<1x8x32xbf16, #tpu.memory_space<vmem>>, vector<1x8x32xbf16>,
    return
  }
  func.func @transform_0(%arg0: i32, %arg1: i32) -> (i32, i32, i32) {
    %c0_i32 = arith.constant 0 : i32
    %c0_i32_0 = arith.constant 0 : i32
    return %arg0, %arg1, %c0_i32 : i32, i32, i32
  }
  func.func @transform_1(%arg0: i32, %arg1: i32) -> (i32, i32) {
    %c0_i32 = arith.constant 0 : i32
    %c0_i32_0 = arith.constant 0 : i32
    %c0_i32_1 = arith.constant 0 : i32
    return %c0_i32, %c0_i32_0 : i32, i32
  }
  func.func @transform_2(%arg0: i32, %arg1: i32) -> (i32, i32, i32) {
    %c0_i32 = arith.constant 0 : i32
    %c0_i32_0 = arith.constant 0 : i32
    return %arg0, %arg1, %c0_i32 : i32, i32, i32
  }
  func.func @transform_3(%arg0: i32, %arg1: i32) -> (i32, i32, i32) {
    %c0_i32 = arith.constant 0 : i32
    %c0_i32_0 = arith.constant 0 : i32
    return %arg0, %arg1, %c0_i32 : i32, i32, i32
  }
}

</mosaic_0001>

<llo_original>
// kernel: tpu_custom_call.1
$region0: #{tpu_custom_call.1}
  #allocation0 [shape = 'u32[]', space=smem, size = 0x4, offset = 0x4, fixed_abs, tag = 'smem constant byte address 0x4 - core index']
  #allocation1 [shape = 'u32[144,128]{1,0:T(1,128)}', space=vmem, size = 0x12000, scoped, tag = 'internal scratch']
  %s0 = inlined_call_operand.hbm [shape: bf16[2,8,32], index: 0, kind: input, shape index: {}]
  %s1 = inlined_call_operand.hbm [shape: bf16[32,64], index: 1, kind: input, shape index: {}]
  %s2 = inlined_call_operand.hbm [shape: bf16[2,8,32], index: 2, kind: output, shape index: {0}]
  %s3 = inlined_call_operand.hbm [shape: bf16[2,8,32], index: 3, kind: output, shape index: {1}]
  %4 = xla_tuple %s2, %s3
  %s5 = sld [smem:[#allocation0]]
  $region57: #{tpu_custom_call.1} parent=0
    _
  %s7 = ssub.s32 1, %s5
  %s8 = scalar_select 0, %s7, %s5
  $region1: #{tpu_custom_call.1} parent=0
    #allocation2 [shape = 'u8[4096]{0}', space=vmem, size = 0x1000, scoped, tag = 'input window, operand 0']
    #allocation3 [shape = 's32[2]{0}', space=sflag, size = 0x8, scoped, tag = 'scoped memory for tpu_custom_call.1']
    #allocation4 [shape = 's32[2]{0}', space=sflag, size = 0x8, scoped, tag = 'scoped memory for tpu_custom_call.1']
    #allocation5 [shape = 'u8[8192]{0}', space=vmem, size = 0x2000, scoped, tag = 'input window, operand 1, single buffered']
    #allocation6 [shape = 's32[1]{0}', space=sflag, size = 0x4, scoped, tag = 'scoped memory for tpu_custom_call.1']
    #allocation7 [shape = 'u8[4096]{0}', space=vmem, size = 0x1000, scoped, tag = 'output window, operand 0']
    #allocation8 [shape = 'u8[4096]{0}', space=vmem, size = 0x1000, scoped, tag = 'output window, operand 1']
    #allocation9 [shape = 's32[2]{0}', space=sflag, size = 0x8, scoped, tag = 'scoped memory for tpu_custom_call.1']
    %9 = vsyncpa [#allocation3], 0
    %s10 = scalar_lea.sflag [#allocation3], 1
    %11 = vsyncpa %s10, 0
    %12 = vsyncpa [#allocation6], 0
    %13 = vsyncpa [#allocation4], 0
    %s14 = scalar_lea.sflag [#allocation4], 1
    %15 = vsyncpa %s14, 0
    %16 = vsyncpa [#allocation9], 0
    %s17 = scalar_lea.sflag [#allocation9], 1
    %18 = vsyncpa %s17, 0
    loop: start=0, step=1, limit=4
    $region2: #{tpu_custom_call.1} parent=1 // loop_pre_header
      _
    $region3: #{tpu_custom_call.1} parent=1 // loop_header
      %s20 = sphi 0, %s24
      %p21 = scmp.ge.s32.totalorder %s20, 4
      %s27 = sphi 0, %s39
      %s28 = sphi 0, %s35
      %s29 = sphi 0, %s27
      %s30 = sphi 0, %s28
      %s31 = sphi 0, %s29
      %s32 = sphi 0, %s30
      %s44 = sphi 0, %s46
      %s47 = sphi 0, %s44
      %s48 = sphi 0, %s47
      %s64 = sphi 0, %s48
      %s68 = sphi 0, %s68
      %s70 = sphi 0, %s68
      %s71 = sphi 0, %s70
      %s85 = sphi 0, %s71
      %s93 = sphi 0, %s95
      %s96 = sphi 0, %s93
      %s97 = sphi 0, %s96
      %s113 = sphi 0, %s97
      %s121 = sphi 0, %s123
      %s124 = sphi 0, %s121
      %s125 = sphi 0, %s124
      %s141 = sphi 0, %s125
    $region4: #{tpu_custom_call.1} parent=1 // loop_header_branch
      %23 = sbr.rel (%p21) target = $region8
    $region5: #{tpu_custom_call.1} parent=1 // loop_body
      %s25 = ssub.s32 %s20, 1
      %s26 = ssub.s32 %s20, 2
      %s33 = sadd.s32 1, %s28
      %p34 = scmp.ge.s32.totalorder %s33, 1
      %s35 = scalar_select %p34, 0, %s33
      %s36 = sadd.s32 1, %s27
      %s37 = scalar_select %p34, %s36, %s27
      %p38 = scmp.ge.s32.totalorder %s37, 2
      %s39 = scalar_select %p38, 0, %s37
      %s40 = ssub.s32 %s27, %s39
      %s41 = ssub.s32 %s28, %s35
      %s42 = sor.u32 %s40, %s41
      %p43 = scmp.eq.s32.totalorder %s42, 0
      %s45 = sadd.s32 %s44, 1
      %s46 = scalar_select %p43, %s44, %s45
      %p49 = pneg %p43
      %p50 = scmp.eq.s32.totalorder %s20, 1
      %p51 = por %p49, %p50
      %p52 = scmp.ne.s32.totalorder %s44, %s47
      %p53 = scmp.eq.s32.totalorder %s20, 0
      %p54 = por %p52, %p53
      %p55 = scmp.ne.s32.totalorder %s44, %s47
      %p56 = scmp.eq.s32.totalorder %s25, 1
      %p57 = por %p55, %p56
      %p58 = scmp.ne.s32.totalorder %s47, %s48
      %p59 = scmp.eq.s32.totalorder %s25, 0
      %p60 = por %p58, %p59
      %p61 = scmp.ne.s32.totalorder %s47, %s48
      %p62 = scmp.eq.s32.totalorder %s26, 1
      %p63 = por %p61, %p62
      %p65 = scmp.ne.s32.totalorder %s48, %s64
      %p66 = scmp.eq.s32.totalorder %s26, 0
      %p67 = por %p65, %p66
      %s69 = sadd.s32 %s68, 1
      %p72 = scmp.eq.s32.totalorder %s20, 1
      %p73 = scmp.ne.s32.totalorder %s68, %s70
      %p74 = scmp.eq.s32.totalorder %s20, 0
      %p75 = por %p73, %p74
      %p76 = scmp.ne.s32.totalorder %s68, %s70
      %p77 = scmp.eq.s32.totalorder %s25, 1
      %p78 = por %p76, %p77
      %p79 = scmp.ne.s32.totalorder %s70, %s71
      %p80 = scmp.eq.s32.totalorder %s25, 0
      %p81 = por %p79, %p80
      %p82 = scmp.ne.s32.totalorder %s70, %s71
      %p83 = scmp.eq.s32.totalorder %s26, 1
      %p84 = por %p82, %p83
      %p86 = scmp.ne.s32.totalorder %s71, %s85
      %p87 = scmp.eq.s32.totalorder %s26, 0
      %p88 = por %p86, %p87
      %s89 = ssub.s32 %s27, %s39
      %s90 = ssub.s32 %s28, %s35
      %s91 = sor.u32 %s89, %s90
      %p92 = scmp.eq.s32.totalorder %s91, 0
      %s94 = sadd.s32 %s93, 1
      %s95 = scalar_select %p92, %s93, %s94
      %p98 = pneg %p92
      %p99 = scmp.eq.s32.totalorder %s20, 1
      %p100 = por %p98, %p99
      %p101 = scmp.ne.s32.totalorder %s93, %s96
      %p102 = scmp.eq.s32.totalorder %s20, 0
      %p103 = por %p101, %p102
      %p104 = scmp.ne.s32.totalorder %s93, %s96
      %p105 = scmp.eq.s32.totalorder %s25, 1
      %p106 = por %p104, %p105
      %p107 = scmp.ne.s32.totalorder %s96, %s97
      %p108 = scmp.eq.s32.totalorder %s25, 0
      %p109 = por %p107, %p108
      %p110 = scmp.ne.s32.totalorder %s96, %s97
      %p111 = scmp.eq.s32.totalorder %s26, 1
      %p112 = por %p110, %p111
      %p114 = scmp.ne.s32.totalorder %s97, %s113
      %p115 = scmp.eq.s32.totalorder %s26, 0
      %p116 = por %p114, %p115
      %s117 = ssub.s32 %s27, %s39
      %s118 = ssub.s32 %s28, %s35
      %s119 = sor.u32 %s117, %s118
      %p120 = scmp.eq.s32.totalorder %s119, 0
      %s122 = sadd.s32 %s121, 1
      %s123 = scalar_select %p120, %s121, %s122
      %p126 = pneg %p120
      %p127 = scmp.eq.s32.totalorder %s20, 1
      %p128 = por %p126, %p127
      %p129 = scmp.ne.s32.totalorder %s121, %s124
      %p130 = scmp.eq.s32.totalorder %s20, 0
      %p131 = por %p129, %p130
      %p132 = scmp.ne.s32.totalorder %s121, %s124
      %p133 = scmp.eq.s32.totalorder %s25, 1
      %p134 = por %p132, %p133
      %p135 = scmp.ne.s32.totalorder %s124, %s125
      %p136 = scmp.eq.s32.totalorder %s25, 0
      %p137 = por %p135, %p136
      %p138 = scmp.ne.s32.totalorder %s124, %s125
      %p139 = scmp.eq.s32.totalorder %s26, 1
      %p140 = por %p138, %p139
      %p142 = scmp.ne.s32.totalorder %s125, %s141
      %p143 = scmp.eq.s32.totalorder %s26, 0
      %p144 = por %p142, %p143
      %p145 = scmp.le.s32.totalorder 1, %s20
      %p146 = scmp.lt.s32.totalorder %s20, 3
      %p147 = pnand %p145, %p146
      %p148 = pneg %p147
      // Predicated region
      $region9: #{tpu_custom_call.1} parent=5 // pred_check
        _
      $region10: #{tpu_custom_call.1} parent=5 // pred_check_branch
        %150 = sbr.rel (%p147) target = $region12
      $region11: #{tpu_custom_call.1} parent=5 // pred_region
        %s151 = ssub.s32 %s20, 1
        // Predicated region
        $region13: #{tpu_custom_call.1} parent=11 // pred_check
          %p152 = pneg %p81
        $region14: #{tpu_custom_call.1} parent=11 // pred_check_branch
          %154 = sbr.rel (%p152) target = $region16
        $region15: #{tpu_custom_call.1} parent=11 // pred_region
          %s156 = ssub.s32 256, 256
          %157 = vsyncadd [#allocation6], %s156
          %s158 = sshll.u32 [#allocation5], 4
          %s159 = int_to_ptr.vmem [resolvable:$true] %s158
          %164 = dma.hbm_to_vmem [thread:$0]  %s1, 256, %s159, [#allocation6], 64, 64, 4
        $region16: #{tpu_custom_call.1} parent=11 // pred_fallthru
          _
      $region12: #{tpu_custom_call.1} parent=5 // pred_fallthru
        _
      %p165 = scmp.lt.s32.totalorder %s20, 2
      // Predicated region
      $region17: #{tpu_custom_call.1} parent=5 // pred_check
        %p166 = pneg %p165
      $region18: #{tpu_custom_call.1} parent=5 // pred_check_branch
        %168 = sbr.rel (%p166) target = $region20
      $region19: #{tpu_custom_call.1} parent=5 // pred_region
        // Predicated region
        $region21: #{tpu_custom_call.1} parent=19 // pred_check
          %p169 = pneg %p54
        $region22: #{tpu_custom_call.1} parent=19 // pred_check_branch
          %171 = sbr.rel (%p169) target = $region24
        $region23: #{tpu_custom_call.1} parent=19 // pred_region
          %s172 = sand.u32 %s44, 1
          %s173 = scalar_lea.sflag [#allocation3], %s172
          %s174 = sand.u32 %s44, 1
          %s175 = smul.addr %s174, 4
          %s176 = scalar_lea.vmem [#allocation2], %s175
          %s178 = ssub.s32 64, 64
          %179 = vsyncadd %s173, %s178
          %s180 = sadd.s32 %s28, %s27
          %s181 = smul.addr %s180, 64
          %s182 = scalar_lea.hbm %s0, %s181
          %s184 = sshll.u32 %s176, 4
          %s185 = int_to_ptr.vmem [resolvable:$true] %s184
          %187 = dma.hbm_to_vmem [thread:$0]  %s182, 64, %s185, %s173
        $region24: #{tpu_custom_call.1} parent=19 // pred_fallthru
          _
      $region20: #{tpu_custom_call.1} parent=5 // pred_fallthru
        _
      %p188 = scmp.le.s32.totalorder 1, %s20
      %p189 = scmp.lt.s32.totalorder %s20, 3
      %p190 = pnand %p188, %p189
      %p191 = pneg %p190
      // Predicated region
      $region25: #{tpu_custom_call.1} parent=5 // pred_check
        _
      $region26: #{tpu_custom_call.1} parent=5 // pred_check_branch
        %193 = sbr.rel (%p190) target = $region28
      $region27: #{tpu_custom_call.1} parent=5 // pred_region
        %s194 = ssub.s32 %s20, 1
        %s195 = sand.u32 %s47, 1
        %s196 = scalar_lea.sflag [#allocation3], %s195
        %s197 = sand.u32 %s47, 1
        %s198 = smul.addr %s197, 4
        %s199 = scalar_lea.vmem [#allocation2], %s198
        // Predicated region
        $region29: #{tpu_custom_call.1} parent=27 // pred_check
          %p200 = pneg %p60
        $region30: #{tpu_custom_call.1} parent=27 // pred_check_branch
          %202 = sbr.rel (%p200) target = $region32
        $region31: #{tpu_custom_call.1} parent=27 // pred_region
          %203 = dma.done %s196, 64
        $region32: #{tpu_custom_call.1} parent=27 // pred_fallthru
          _
        // Predicated region
        $region33: #{tpu_custom_call.1} parent=27 // pred_check
          %p204 = pneg %p81
        $region34: #{tpu_custom_call.1} parent=27 // pred_check_branch
          %206 = sbr.rel (%p204) target = $region36
        $region35: #{tpu_custom_call.1} parent=27 // pred_region
          %207 = dma.done [#allocation6], 256
        $region36: #{tpu_custom_call.1} parent=27 // pred_fallthru
          _
        %s208 = sand.u32 %s47, 1
        %s209 = scalar_lea.sflag [#allocation3], %s208
        %s210 = sand.u32 %s47, 1
        %s211 = smul.addr %s210, 4
        %s212 = scalar_lea.vmem [#allocation2], %s211
        %p213 = pneg %p60
        %p214 = pneg %p57
        %p215 = pneg %p81
        %p216 = pneg %p78
        %p217 = pneg %p109
        %p218 = pneg %p106
        %s219 = sand.u32 %s96, 1
        %s220 = scalar_lea.sflag [#allocation4], %s219
        %s221 = sand.u32 %s96, 1
        %s222 = smul.addr %s221, 4
        %s223 = scalar_lea.vmem [#allocation7], %s222
        %p224 = pneg %p137
        %p225 = pneg %p134
        %s226 = sand.u32 %s124, 1
        %s227 = scalar_lea.sflag [#allocation9], %s226
        %s228 = sand.u32 %s124, 1
        %s229 = smul.addr %s228, 4
        %s230 = scalar_lea.vmem [#allocation8], %s229
        %v232 = vld [vmem:[%s199] sm:$0xf]
        %v233 = vld [vmem:[#allocation5] sm:$0xf]
        %v234 = vld [vmem:[#allocation5 + $0x4] sm:$0xf]
        %v235 = vld [vmem:[#allocation5 + $0x8] sm:$0xf]
        %v236 = vld [vmem:[#allocation5 + $0xc] sm:$0xf]
        %v241 = vunpack.c.l.b16 %v233
        %v242 = vunpack.c.l.b16 %v234
        %v243 = vunpack.c.l.b16 %v235
        %v244 = vunpack.c.l.b16 %v236
        %v245 = vpack.c.b16 %v242, %v241
        %v246 = vpack.c.b16 %v244, %v243
        %vm249 = vcmask 261120
        %v251 = vsel %vm249, %v232, 0
        %253 = vmatprep.subr.bf16.mxu0 0
        %254 = vmatpush1.bf16.msra.mxu0 0
        %255 = vmatprep.subr.bf16.mxu0 0
        %256 = vmatpush1.bf16.msra.mxu0 0
        %257 = vmatprep.subr.bf16.mxu0 0
        %258 = vmatpush1.bf16.msra.mxu0 0
        %259 = vmatprep.subr.bf16.mxu0 0
        %260 = vmatpush1.bf16.msra.mxu0 0
        %261 = vmatprep.subr.bf16.mxu0 0
        %262 = vmatpush1.bf16.msra.mxu0 0
        %263 = vmatprep.subr.bf16.mxu0 0
        %264 = vmatpush1.bf16.msra.mxu0 0
        %265 = vmatprep.subr.bf16.mxu0 0
        %266 = vmatpush1.bf16.msra.mxu0 %v246
        %267 = vmatprep.subr.bf16.mxu0 0
        %268 = vmatpush1.bf16.msra.mxu0 %v245
        %269 = vmatprep.subr.bf16.mxu0 0
        %270 = vmatpush2.bf16.msra.mxu0 0
        %271 = vmatprep.subr.bf16.mxu0 0
        %272 = vmatpush2.bf16.msra.mxu0 0
        %273 = vmatprep.subr.bf16.mxu0 0
        %274 = vmatpush2.bf16.msra.mxu0 0
        %275 = vmatprep.subr.bf16.mxu0 0
        %276 = vmatpush2.bf16.msra.mxu0 0
        %277 = vmatprep.subr.bf16.mxu0 0
        %278 = vmatpush2.bf16.msra.mxu0 0
        %279 = vmatprep.subr.bf16.mxu0 0
        %280 = vmatpush2.bf16.msra.mxu0 0
        %281 = vmatprep.subr.bf16.mxu0 0
        %282 = vmatpush2.bf16.msra.mxu0 0
        %283 = vmatprep.subr.bf16.mxu0 0
        %284 = vmatpush2.bf16.msra.mxu0 0
        %285 = vmatprep.mubr.bf16.mxu0 0
        %286 = vmatmul.mubr.bf16.gmra.mxu0 %v251
        %v287 = vpop.f32.mrf.mxu0
        %v288 = vadd.f32 0.0, %v287
        %v289 = vpop.f32.mrf.mxu0
        %v290 = vpop.f32.mrf.mxu0
        %v291 = vpop.f32.mrf.mxu0
        %292 = vdwg.mxu0
        %v293 = vpack.c.bf16 %v288, %v288
        %vm294 = vcmask 257024
        %295 = vst.msk [vmem:[%s223] sm:$0xf] %vm294, %v293
        %v297 = vunpack.c.l.b16 %v293
        %v298 = vpack.c.b16 %v297, %v297
        %299 = vrot.lane.b32.xlu0 %v298, 96
        %v300 = vpop.permute.xlu0 %299
        %302 = vst.msk [vmem:[%s230] sm:$0xf] %vm294, %v300
        %s303 = sand.u32 %s96, 1
        %s304 = scalar_lea.sflag [#allocation4], %s303
        %s305 = sand.u32 %s96, 1
        %s306 = smul.addr %s305, 4
        %s307 = scalar_lea.vmem [#allocation7], %s306
        %s308 = sand.u32 %s124, 1
        %s309 = scalar_lea.sflag [#allocation9], %s308
        %s310 = sand.u32 %s124, 1
        %s311 = smul.addr %s310, 4
        %s312 = scalar_lea.vmem [#allocation8], %s311
        // Predicated region
        $region37: #{tpu_custom_call.1} parent=27 // pred_check
          %p313 = pneg %p106
        $region38: #{tpu_custom_call.1} parent=27 // pred_check_branch
          %315 = sbr.rel (%p313) target = $region40
        $region39: #{tpu_custom_call.1} parent=27 // pred_region
          %s317 = ssub.s32 64, 64
          %318 = vsyncadd %s304, %s317
          %s319 = sadd.s32 %s30, %s29
          %s320 = smul.addr %s319, 64
          %s321 = scalar_lea.hbm %s2, %s320
          %s323 = sshll.u32 %s307, 4
          %s324 = int_to_ptr.vmem [resolvable:$true] %s323
          %326 = dma.vmem_to_hbm [thread:$0]  %s324, 64, %s321, %s304
        $region40: #{tpu_custom_call.1} parent=27 // pred_fallthru
          _
        // Predicated region
        $region41: #{tpu_custom_call.1} parent=27 // pred_check
          %p327 = pneg %p134
        $region42: #{tpu_custom_call.1} parent=27 // pred_check_branch
          %329 = sbr.rel (%p327) target = $region44
        $region43: #{tpu_custom_call.1} parent=27 // pred_region
          %s331 = ssub.s32 64, 64
          %332 = vsyncadd %s309, %s331
          %s333 = sadd.s32 %s30, %s29
          %s334 = smul.addr %s333, 64
          %s335 = scalar_lea.hbm %s3, %s334
          %s337 = sshll.u32 %s312, 4
          %s338 = int_to_ptr.vmem [resolvable:$true] %s337
          %340 = dma.vmem_to_hbm [thread:$0]  %s338, 64, %s335, %s309
        $region44: #{tpu_custom_call.1} parent=27 // pred_fallthru
          _
      $region28: #{tpu_custom_call.1} parent=5 // pred_fallthru
        _
      %p341 = scmp.le.s32.totalorder 2, %s20
      // Predicated region
      $region45: #{tpu_custom_call.1} parent=5 // pred_check
        %p342 = pneg %p341
      $region46: #{tpu_custom_call.1} parent=5 // pred_check_branch
        %344 = sbr.rel (%p342) target = $region48
      $region47: #{tpu_custom_call.1} parent=5 // pred_region
        %s345 = ssub.s32 %s20, 2
        // Predicated region
        $region49: #{tpu_custom_call.1} parent=47 // pred_check
          %p346 = pneg %p112
        $region50: #{tpu_custom_call.1} parent=47 // pred_check_branch
          %348 = sbr.rel (%p346) target = $region52
        $region51: #{tpu_custom_call.1} parent=47 // pred_region
          %s349 = sand.u32 %s97, 1
          %s350 = scalar_lea.sflag [#allocation4], %s349
          %s351 = sand.u32 %s97, 1
          %s352 = smul.addr %s351, 4
          %s353 = scalar_lea.vmem [#allocation7], %s352
          %354 = dma.done %s350, 64
        $region52: #{tpu_custom_call.1} parent=47 // pred_fallthru
          _
        // Predicated region
        $region53: #{tpu_custom_call.1} parent=47 // pred_check
          %p355 = pneg %p140
        $region54: #{tpu_custom_call.1} parent=47 // pred_check_branch
          %357 = sbr.rel (%p355) target = $region56
        $region55: #{tpu_custom_call.1} parent=47 // pred_region
          %s358 = sand.u32 %s125, 1
          %s359 = scalar_lea.sflag [#allocation9], %s358
          %s360 = sand.u32 %s125, 1
          %s361 = smul.addr %s360, 4
          %s362 = scalar_lea.vmem [#allocation8], %s361
          %363 = dma.done %s359, 64
        $region56: #{tpu_custom_call.1} parent=47 // pred_fallthru
          _
      $region48: #{tpu_custom_call.1} parent=5 // pred_fallthru
        _
    $region6: #{tpu_custom_call.1} parent=1 // loop_footer
      %s24 = sadd.s32 1, %s20
    $region7: #{tpu_custom_call.1} parent=1 // loop_footer_branch
      %19 = sbr.rel target = $region3
    $region8: #{tpu_custom_call.1} parent=1 // loop_exit
      _
    %364 = vsyncpa [#allocation3], 1
    %s365 = scalar_lea.sflag [#allocation3], 1
    %366 = vsyncpa %s365, 1
    %367 = vsyncpa [#allocation6], 1
    %368 = vsyncpa [#allocation4], 1
    %s369 = scalar_lea.sflag [#allocation4], 1
    %370 = vsyncpa %s369, 1
    %371 = vsyncpa [#allocation9], 1
    %s372 = scalar_lea.sflag [#allocation9], 1
    %373 = vsyncpa %s372, 1

</llo_original>
